<compile_context>
chip_gen: v7x
topology: tpu7x:2x2x1
jax: 0.10.0
libtpu: 0.0.40
codegen_flags: <defaults>
</compile_context>

<pallas_src>
import functools

import jax
import jax.numpy as jnp
from jax.experimental import pallas as pl
from jax.experimental.pallas import tpu as pltpu


def _round_up(v, m):
    return ((v + m - 1) // m) * m


# ---------------------------------------------------------------------------
# Packed kernel: each node's N neighbours live in one lane-packed row.
# ---------------------------------------------------------------------------
def _graph_attn_packed_kernel(nbr_ref, e1_ref, w_ref, b_ref,
                              attn_ref, nbr_out_ref, *, alpha, n_nbr, o):
    # nbr_ref:     (TG, N*F)       bf16/f32 neighbour rows, lane-packed per node
    # e1_ref:      (TG, 1)         f32 att1(tran(x)) per node (precomputed)
    # w_ref:       (N*F, N*O + N)  [blockdiag(W) | blockdiag(W @ a2^T)]
    # b_ref:       (1,   N*O + N)  matching bias row (f32)
    # attn_ref:    (TG, O)         attended features per node
    # nbr_out_ref: (TG, N*O)       tran(neighbour), lane-dense
    t = jnp.dot(nbr_ref[...], w_ref[...], preferred_element_type=jnp.float32)
    t = t + b_ref[...]

    # Dominant output stream: one dense, lane-aligned full-block store.
    nbr_out_ref[...] = t[:, :n_nbr * o].astype(nbr_out_ref.dtype)

    # Attention logits: e1 (per node) + e2 (per neighbour, folded matmul cols).
    e2 = t[:, n_nbr * o:]                                    # (TG, N)
    logits = e1_ref[...] + e2                                # (TG, N)
    z = jnp.where(logits >= 0, logits, alpha * logits)       # LeakyReLU(alpha)
    z = z - jnp.max(z, axis=-1, keepdims=True)
    p = jnp.exp(z)
    a = p * pl.reciprocal(jnp.sum(p, axis=-1, keepdims=True), approx=True)

    # attn = sum_j a[:, j] * tran(nbr_j); unrolled over the (small) N — each
    # element of the big slab is touched exactly once on the VPU.
    acc = a[:, 0:1] * t[:, 0:o]
    for j in range(1, n_nbr):
        acc = acc + a[:, j:j + 1] * t[:, j * o:(j + 1) * o]
    attn_ref[...] = acc.astype(attn_ref.dtype)


# ---------------------------------------------------------------------------
# Fallback kernel (large N / F / O): neighbour-row layout, att2 folded as an
# extra matmul column (same structure as the previously validated version).
# ---------------------------------------------------------------------------
def _graph_attn_rows_kernel(nbr_ref, e1_ref, w_ref, b_ref,
                            attn_ref, nbr_out_ref, *, alpha, n_nbr, o):
    # nbr_ref:     (TG*N, F)    neighbour rows, node-major
    # e1_ref:      (TG, 1)      att1(tran(x)) per node
    # w_ref:       (F, O+1)     [W | W @ a2^T]
    # b_ref:       (1, O+1)
    # attn_ref:    (TG, O)
    # nbr_out_ref: (TG*N, O)
    tg = e1_ref.shape[0]
    t = jnp.dot(nbr_ref[...], w_ref[...],
                preferred_element_type=jnp.float32) + b_ref[...]
    nbr_out_ref[...] = t[:, :o].astype(nbr_out_ref.dtype)

    t3 = t.reshape(tg, n_nbr, o + 1)
    nbr_t = t3[..., :o]                                      # (TG, N, O)
    e2 = t3[..., o:o + 1]                                    # (TG, N, 1)
    logits = e1_ref[...][:, :, None] + e2                    # (TG, N, 1)
    z = jnp.where(logits >= 0, logits, alpha * logits)
    z = z - jnp.max(z, axis=1, keepdims=True)
    p = jnp.exp(z)
    aw = p / jnp.sum(p, axis=1, keepdims=True)               # softmax over N
    attn = jnp.sum(aw * nbr_t, axis=1)                       # (TG, O)
    attn_ref[...] = attn.astype(attn_ref.dtype)


def _node_axis_semantics():
    """Shard the node-block grid axis across v7x's two TensorCores."""
    try:
        kind = jax.devices()[0].device_kind.lower()
    except Exception:
        kind = ""
    if "v7" in kind or "tpu7" in kind:
        return (pltpu.CORE_PARALLEL,)
    return ("parallel",)


def graph_attn_forward(x, neighbor, params, *, alpha=0.2, block_nodes=None,
                       compute_dtype=jnp.bfloat16, out_dtype=None,
                       vmem_budget_bytes=16 * 1024 * 1024):
    """x: (B, C, F); neighbor: (B, N, C, F).  Returns (attn_x, transformed_neighbor)."""
    B, C, F = x.shape
    N = neighbor.shape[1]
    w, b, a1, a2 = params["w"], params["b"], params["a1"], params["a2"]
    O = w.shape[1]
    G = B * C                                  # "node" axis = batch x channel
    out_dtype = x.dtype if out_dtype is None else out_dtype

    # ---- one-time parameter folding / e1 hoist (plain XLA, tiny) -----------
    wa2 = w @ a2.T                                           # (F, 1)
    ba2 = b @ a2.T                                           # (1, 1)
    e1 = (x.reshape(G, F) @ (w @ a1.T) + b @ a1.T).astype(jnp.float32)   # (G, 1)

    # Node-major neighbour rows.  For C == 1 (the only case the torch module
    # supports) the transpose is a no-op and the reshapes are free bitcasts.
    # TODO(synk): for C > 1, index (B, N, C, F) directly via the BlockSpec
    # index_map instead of materializing this transpose.
    nbr_node_major = neighbor.transpose(0, 2, 1, 3)          # (B, C, N, F)

    # ---- path selection and VMEM-budgeted block sizing ----------------------
    packed = (N * F <= 1024) and (N * (O + 1) <= 1024) and (N <= 32)
    in_bytes = jnp.dtype(compute_dtype).itemsize
    out_bytes = jnp.dtype(out_dtype).itemsize
    per_node_bytes = (2 * N * F * in_bytes           # neighbour input (x2 buffers)
                      + 2 * N * O * out_bytes        # transformed output (x2 buffers)
                      + 2 * (O + 1) * 4              # attn output + e1 input blocks
                      + N * (O + 1) * 4              # f32 matmul intermediate
                      + 4 * O + 24 * N + 64)         # softmax temporaries / slack

    if block_nodes is None:
        tg = max(8, vmem_budget_bytes // per_node_bytes)
        tg = min(tg, _round_up(G, 8))
        if G >= 16:            # keep >= 2 blocks so megacore / CORE_PARALLEL can split
            tg = min(tg, _round_up(pl.cdiv(G, 2), 8))
        tg = (tg // 256) * 256 if tg >= 512 else (tg // 8) * 8   # MXU-tall when big
        tg = max(tg, 8)
    else:
        tg = max(8, _round_up(block_nodes, 8))
    num_blocks = pl.cdiv(G, tg)

    if packed:
        # Block-diagonal folded weights: one matmul yields tran(nbr) lane-dense
        # plus the att2 logits as N trailing columns.
        w_pack = jnp.concatenate(
            [jnp.kron(jnp.eye(N, dtype=w.dtype), w),
             jnp.kron(jnp.eye(N, dtype=w.dtype), wa2)], axis=1)       # (N*F, N*O+N)
        b_pack = jnp.concatenate(
            [jnp.tile(b, (1, N)), jnp.tile(ba2, (1, N))], axis=1)     # (1, N*O+N)
        nbr_in = nbr_node_major.reshape(G, N * F).astype(compute_dtype)

        kernel = functools.partial(_graph_attn_packed_kernel,
                                   alpha=alpha, n_nbr=N, o=O)
        grid_spec = pltpu.PrefetchScalarGridSpec(
            num_scalar_prefetch=0,
            grid=(num_blocks,),
            in_specs=[
                pl.BlockSpec((tg, N * F), lambda i: (i, 0)),          # neighbours
                pl.BlockSpec((tg, 1), lambda i: (i, 0)),              # e1
                pl.BlockSpec((N * F, N * O + N), lambda i: (0, 0)),   # w_pack
                pl.BlockSpec((1, N * O + N), lambda i: (0, 0)),       # b_pack
            ],
            out_specs=[
                pl.BlockSpec((tg, O), lambda i: (i, 0)),              # attn
                pl.BlockSpec((tg, N * O), lambda i: (i, 0)),          # tran(nbr)
            ])
        out_shape = (jax.ShapeDtypeStruct((G, O), jnp.float32),
                     jax.ShapeDtypeStruct((G, N * O), out_dtype))
        args = (nbr_in, e1, w_pack.astype(compute_dtype), b_pack.astype(jnp.float32))
        weight_bytes = (N * F) * (N * O + N) * in_bytes
    else:
        w_aug = jnp.concatenate([w, wa2], axis=1)                     # (F, O+1)
        b_aug = jnp.concatenate([b, ba2], axis=1)                     # (1, O+1)
        nbr_in = nbr_node_major.reshape(G * N, F).astype(compute_dtype)

        kernel = functools.partial(_graph_attn_rows_kernel,
                                   alpha=alpha, n_nbr=N, o=O)
        grid_spec = pltpu.PrefetchScalarGridSpec(
            num_scalar_prefetch=0,
            grid=(num_blocks,),
            in_specs=[
                pl.BlockSpec((tg * N, F), lambda i: (i, 0)),
                pl.BlockSpec((tg, 1), lambda i: (i, 0)),
                pl.BlockSpec((F, O + 1), lambda i: (0, 0)),
                pl.BlockSpec((1, O + 1), lambda i: (0, 0)),
            ],
            out_specs=[
                pl.BlockSpec((tg, O), lambda i: (i, 0)),
                pl.BlockSpec((tg * N, O), lambda i: (i, 0)),
            ])
        out_shape = (jax.ShapeDtypeStruct((G, O), jnp.float32),
                     jax.ShapeDtypeStruct((G * N, O), out_dtype))
        args = (nbr_in, e1, w_aug.astype(compute_dtype), b_aug.astype(jnp.float32))
        weight_bytes = F * (O + 1) * in_bytes

    # Explicit scoped-VMEM limit derived from the block sizes; clamped so the
    # same tiling is safe on v7x's 64 MiB physical VMEM.
    accounted = tg * per_node_bytes + 4 * weight_bytes + (2 << 20)
    vmem_limit = int(min(max(accounted * 5 // 4, 32 << 20), 48 << 20))

    attn_flat, nbr_flat = pl.pallas_call(
        kernel,
        grid_spec=grid_spec,
        out_shape=out_shape,
        compiler_params=pltpu.CompilerParams(
            dimension_semantics=_node_axis_semantics(),
            vmem_limit_bytes=vmem_limit),
    )(*args)

    attn_x = attn_flat.reshape(B, C, O).astype(x.dtype)
    nbr_t = nbr_flat.reshape(B, C, N, O).transpose(0, 2, 1, 3)   # (B, N, C, O)
    return attn_x, nbr_t


def reference(x, neighbor, params, alpha=0.2):
    """Pure-JAX reference mirroring the torch forward (with C == 1)."""
    w, b, a1, a2 = params["w"], params["b"], params["a1"], params["a2"]
    x_t = x @ w + b                                         # (B, C, O)
    nbr_t = neighbor @ w + b                                # (B, N, C, O)
    e1 = jnp.sum(x_t * a1, axis=-1, keepdims=True)          # (B, C, 1)
    e2 = jnp.sum(nbr_t * a2, axis=-1, keepdims=True)        # (B, N, C, 1)
    logits = e1[:, None] + e2                               # (B, N, C, 1)
    z = jnp.where(logits >= 0, logits, alpha * logits)      # LeakyReLU
    A = jax.nn.softmax(z, axis=1)                           # softmax over N
    attn = jnp.sum(A * nbr_t, axis=1)                       # (B, C, O)
    return attn, nbr_t


if __name__ == "__main__":
    key = jax.random.PRNGKey(0)
    alpha = 0.2
    F_in, F_out = 16, 32        # in_channels, out_channels

    k = jax.random.split(key, 4)
    lim_t = 1.0 / (F_in ** 0.5)
    lim_a = 1.0 / (F_out ** 0.5)
    params = {
        "w": jax.random.uniform(k[0], (F_in, F_out), jnp.float32, -lim_t, lim_t),
        "b": jax.random.uniform(k[1], (1, F_out), jnp.float32, -lim_t, lim_t),
        "a1": jax.random.uniform(k[2], (1, F_out), jnp.float32, -lim_a, lim_a),
        "a2": jax.random.uniform(k[3], (1, F_out), jnp.float32, -lim_a, lim_a),
    }

    def run(B, C, N, **kw):
        kx, kn = jax.random.split(jax.random.fold_in(key, B * 1000 + N), 2)
        x = jax.random.normal(kx, (B, C, F_in), jnp.float32)
        nbr = jax.random.normal(kn, (B, N, C, F_in), jnp.float32)
        attn, nbr_t = graph_attn_forward(x, nbr, params, alpha=alpha, **kw)
        jax.block_until_ready((attn, nbr_t))
        ref_attn, ref_nbr = reference(x, nbr, params, alpha)
        assert attn.shape == (B, C, F_out)
        assert nbr_t.shape == (B, N, C, F_out)
        # bf16 MXU operands -> slightly looser tolerance than pure-f32.
        assert jnp.allclose(attn, ref_attn, atol=5e-2, rtol=5e-2), "attn mismatch"
        assert jnp.allclose(nbr_t, ref_nbr, atol=5e-2, rtol=5e-2), "neighbor mismatch"

    run(2, 1, 8)                     # single block, lane-packed path
    run(10, 1, 8, block_nodes=8)     # multi-block grid with a partial tail block
    print("KERNEL_OK")
</pallas_src>

<mosaic_0001>
module attributes {stable_mosaic.version = 11 : i64} {
  func.func @_graph_attn_packed_kernel(%arg0: i32, %arg1: memref<8x128xbf16, #tpu.memory_space<vmem>>, %arg2: memref<8x1xf32, #tpu.memory_space<vmem>>, %arg3: memref<128x264xbf16, #tpu.memory_space<vmem>>, %arg4: memref<1x264xf32, #tpu.memory_space<vmem>>, %arg5: memref<8x32xf32, #tpu.memory_space<vmem>>, %arg6: memref<8x256xf32, #tpu.memory_space<vmem>>) attributes {dimension_semantics = [#tpu.dimension_semantics<parallel>], iteration_bounds = array<i64: 1>, scalar_prefetch = 0 : i64, scratch_operands = 0 : i64, tpu.core_type = #tpu.core_type<tc>, window_params = [{transform_indices = @transform_0, window_bounds = array<i64: 8, 128>}, {transform_indices = @transform_1, window_bounds = array<i64: 8, 1>}, {pipeline_mode = #tpu.pipeline_mode<synchronous>, transform_indices = @transform_2, window_bounds = array<i64: 128, 264>}, {pipeline_mode = #tpu.pipeline_mode<synchronous>, transform_indices = @transform_3, window_bounds = array<i64: 1, 264>}, {transform_indices = @transform_4, window_bounds = array<i64: 8, 32>}, {transform_indices = @transform_5, window_bounds = array<i64: 8, 256>}]} {
    %c0 = arith.constant 0 : index
    %c0_0 = arith.constant 0 : index
    %0 = vector.load %arg1[%c0, %c0_0] : memref<8x128xbf16, #tpu.memory_space<vmem>>, vector<8x128xbf16>
    %c0_1 = arith.constant 0 : index
    %c0_2 = arith.constant 0 : index
    %1 = vector.load %arg3[%c0_1, %c0_2] : memref<128x264xbf16, #tpu.memory_space<vmem>>, vector<128x264xbf16>
    %cst = arith.constant dense<0.000000e+00> : vector<8x264xf32>
    %2 = tpu.matmul %0, %1, %cst {dimension_numbers = #tpu.dot_dimension_numbers<[1], [0], [0], [1], [0, 0, 1, 1], [], []>} : vector<8x128xbf16>, vector<128x264xbf16>, vector<8x264xf32> -> vector<8x264xf32>
    %c0_3 = arith.constant 0 : index
    %c0_4 = arith.constant 0 : index
    %3 = vector.load %arg4[%c0_3, %c0_4] : memref<1x264xf32, #tpu.memory_space<vmem>>, vector<1x264xf32>
    %4 = vector.broadcast %3 : vector<1x264xf32> to vector<8x264xf32>
    %5 = arith.addf %2, %4 : vector<8x264xf32>
    %6 = vector.extract_strided_slice %5 {offsets = [0, 0], sizes = [8, 256], strides = [1, 1]} : vector<8x264xf32> to vector<8x256xf32>
    %c0_5 = arith.constant 0 : index
    %c0_6 = arith.constant 0 : index
    %7 = vector.load %arg6[%c0_5, %c0_6] : memref<8x256xf32, #tpu.memory_space<vmem>>, vector<8x256xf32>
    tpu.vector_store %arg6[%c0_5, %c0_6], %6 {strides = array<i32>} : memref<8x256xf32, #tpu.memory_space<vmem>>, vector<8x256xf32>,
    %8 = vector.extract_strided_slice %5 {offsets = [0, 256], sizes = [8, 8], strides = [1, 1]} : vector<8x264xf32> to vector<8x8xf32>
    %c0_7 = arith.constant 0 : index
    %c0_8 = arith.constant 0 : index
    %9 = vector.load %arg2[%c0_7, %c0_8] : memref<8x1xf32, #tpu.memory_space<vmem>>, vector<8x1xf32>
    %10 = vector.broadcast %9 : vector<8x1xf32> to vector<8x8xf32>
    %11 = arith.addf %10, %8 : vector<8x8xf32>
    %cst_9 = arith.constant 0.000000e+00 : f32
    %12 = vector.broadcast %cst_9 : f32 to vector<8x8xf32>
    %13 = arith.cmpf oge, %11, %12 : vector<8x8xf32>
    %cst_10 = arith.constant 2.000000e-01 : f32
    %14 = vector.broadcast %cst_10 : f32 to vector<8x8xf32>
    %15 = arith.mulf %14, %11 : vector<8x8xf32>
    %16 = arith.select %13, %11, %15 : vector<8x8xi1>, vector<8x8xf32>
    %cst_11 = arith.constant dense<0xFF800000> : vector<8xf32>
    %17 = vector.multi_reduction <maximumf>, %16, %cst_11 [1] : vector<8x8xf32> to vector<8xf32>
    %18 = vector.shape_cast %17 : vector<8xf32> to vector<8x1xf32>
    %19 = vector.broadcast %18 : vector<8x1xf32> to vector<8x8xf32>
    %20 = arith.subf %16, %19 : vector<8x8xf32>
    %21 = math.exp %20 : vector<8x8xf32>
    %cst_12 = arith.constant dense<0.000000e+00> : vector<8xf32>
    %22 = vector.multi_reduction <add>, %21, %cst_12 [1] : vector<8x8xf32> to vector<8xf32>
    %23 = vector.shape_cast %22 : vector<8xf32> to vector<8x1xf32>
    %24 = tpu.reciprocal %23 {approx = true} : vector<8x1xf32> -> vector<8x1xf32>
    %25 = vector.broadcast %24 : vector<8x1xf32> to vector<8x8xf32>
    %26 = arith.mulf %21, %25 : vector<8x8xf32>
    %27 = vector.extract_strided_slice %26 {offsets = [0, 0], sizes = [8, 1], strides = [1, 1]} : vector<8x8xf32> to vector<8x1xf32>
    %28 = vector.extract_strided_slice %5 {offsets = [0, 0], sizes = [8, 32], strides = [1, 1]} : vector<8x264xf32> to vector<8x32xf32>
    %29 = vector.broadcast %27 : vector<8x1xf32> to vector<8x32xf32>
    %30 = arith.mulf %29, %28 : vector<8x32xf32>
    %31 = vector.extract_strided_slice %26 {offsets = [0, 1], sizes = [8, 1], strides = [1, 1]} : vector<8x8xf32> to vector<8x1xf32>
    %32 = vector.extract_strided_slice %5 {offsets = [0, 32], sizes = [8, 32], strides = [1, 1]} : vector<8x264xf32> to vector<8x32xf32>
    %33 = vector.broadcast %31 : vector<8x1xf32> to vector<8x32xf32>
    %34 = arith.mulf %33, %32 : vector<8x32xf32>
    %35 = arith.addf %30, %34 : vector<8x32xf32>
    %36 = vector.extract_strided_slice %26 {offsets = [0, 2], sizes = [8, 1], strides = [1, 1]} : vector<8x8xf32> to vector<8x1xf32>
    %37 = vector.extract_strided_slice %5 {offsets = [0, 64], sizes = [8, 32], strides = [1, 1]} : vector<8x264xf32> to vector<8x32xf32>
    %38 = vector.broadcast %36 : vector<8x1xf32> to vector<8x32xf32>
    %39 = arith.mulf %38, %37 : vector<8x32xf32>
    %40 = arith.addf %35, %39 : vector<8x32xf32>
    %41 = vector.extract_strided_slice %26 {offsets = [0, 3], sizes = [8, 1], strides = [1, 1]} : vector<8x8xf32> to vector<8x1xf32>
    %42 = vector.extract_strided_slice %5 {offsets = [0, 96], sizes = [8, 32], strides = [1, 1]} : vector<8x264xf32> to vector<8x32xf32>
    %43 = vector.broadcast %41 : vector<8x1xf32> to vector<8x32xf32>
    %44 = arith.mulf %43, %42 : vector<8x32xf32>
    %45 = arith.addf %40, %44 : vector<8x32xf32>
    %46 = vector.extract_strided_slice %26 {offsets = [0, 4], sizes = [8, 1], strides = [1, 1]} : vector<8x8xf32> to vector<8x1xf32>
    %47 = vector.extract_strided_slice %5 {offsets = [0, 128], sizes = [8, 32], strides = [1, 1]} : vector<8x264xf32> to vector<8x32xf32>
    %48 = vector.broadcast %46 : vector<8x1xf32> to vector<8x32xf32>
    %49 = arith.mulf %48, %47 : vector<8x32xf32>
    %50 = arith.addf %45, %49 : vector<8x32xf32>
    %51 = vector.extract_strided_slice %26 {offsets = [0, 5], sizes = [8, 1], strides = [1, 1]} : vector<8x8xf32> to vector<8x1xf32>
    %52 = vector.extract_strided_slice %5 {offsets = [0, 160], sizes = [8, 32], strides = [1, 1]} : vector<8x264xf32> to vector<8x32xf32>
    %53 = vector.broadcast %51 : vector<8x1xf32> to vector<8x32xf32>
    %54 = arith.mulf %53, %52 : vector<8x32xf32>
    %55 = arith.addf %50, %54 : vector<8x32xf32>
    %56 = vector.extract_strided_slice %26 {offsets = [0, 6], sizes = [8, 1], strides = [1, 1]} : vector<8x8xf32> to vector<8x1xf32>
    %57 = vector.extract_strided_slice %5 {offsets = [0, 192], sizes = [8, 32], strides = [1, 1]} : vector<8x264xf32> to vector<8x32xf32>
    %58 = vector.broadcast %56 : vector<8x1xf32> to vector<8x32xf32>
    %59 = arith.mulf %58, %57 : vector<8x32xf32>
    %60 = arith.addf %55, %59 : vector<8x32xf32>
    %61 = vector.extract_strided_slice %26 {offsets = [0, 7], sizes = [8, 1], strides = [1, 1]} : vector<8x8xf32> to vector<8x1xf32>
    %62 = vector.extract_strided_slice %5 {offsets = [0, 224], sizes = [8, 32], strides = [1, 1]} : vector<8x264xf32> to vector<8x32xf32>
    %63 = vector.broadcast %61 : vector<8x1xf32> to vector<8x32xf32>
    %64 = arith.mulf %63, %62 : vector<8x32xf32>
    %65 = arith.addf %60, %64 : vector<8x32xf32>
    %c0_13 = arith.constant 0 : index
    %c0_14 = arith.constant 0 : index
    %66 = vector.load %arg5[%c0_13, %c0_14] : memref<8x32xf32, #tpu.memory_space<vmem>>, vector<8x32xf32>
    tpu.vector_store %arg5[%c0_13, %c0_14], %65 {strides = array<i32>} : memref<8x32xf32, #tpu.memory_space<vmem>>, vector<8x32xf32>,
    return
  }
  func.func @transform_0(%arg0: i32) -> (i32, i32) {
    %c0_i32 = arith.constant 0 : i32
    %c0_i32_0 = arith.constant 0 : i32
    return %arg0, %c0_i32 : i32, i32
  }
  func.func @transform_1(%arg0: i32) -> (i32, i32) {
    %c0_i32 = arith.constant 0 : i32
    %c0_i32_0 = arith.constant 0 : i32
    return %arg0, %c0_i32 : i32, i32
  }
  func.func @transform_2(%arg0: i32) -> (i32, i32) {
    %c0_i32 = arith.constant 0 : i32
    %c0_i32_0 = arith.constant 0 : i32
    %c0_i32_1 = arith.constant 0 : i32
    return %c0_i32, %c0_i32_0 : i32, i32
  }
  func.func @transform_3(%arg0: i32) -> (i32, i32) {
    %c0_i32 = arith.constant 0 : i32
    %c0_i32_0 = arith.constant 0 : i32
    %c0_i32_1 = arith.constant 0 : i32
    return %c0_i32, %c0_i32_0 : i32, i32
  }
  func.func @transform_4(%arg0: i32) -> (i32, i32) {
    %c0_i32 = arith.constant 0 : i32
    %c0_i32_0 = arith.constant 0 : i32
    return %arg0, %c0_i32 : i32, i32
  }
  func.func @transform_5(%arg0: i32) -> (i32, i32) {
    %c0_i32 = arith.constant 0 : i32
    %c0_i32_0 = arith.constant 0 : i32
    return %arg0, %c0_i32 : i32, i32
  }
}

</mosaic_0001>

<llo_original>
// kernel: tpu_custom_call.1
$region0: #{tpu_custom_call.1}
  #allocation0 [shape = 'u32[]', space=smem, size = 0x4, offset = 0x4, fixed_abs, tag = 'smem constant byte address 0x4 - core index']
  #allocation1 [shape = 'u32[144,128]{1,0:T(1,128)}', space=vmem, size = 0x12000, scoped, tag = 'internal scratch']
  %s0 = inlined_call_operand.vmem [shape: bf16[2,128], index: 0, kind: input, shape index: {}]
  %s1 = inlined_call_operand.vmem [shape: f32[2,1], index: 1, kind: input, shape index: {}]
  %s2 = inlined_call_operand.vmem [shape: bf16[128,264], index: 2, kind: input, shape index: {}]
  %s3 = inlined_call_operand.vmem [shape: f32[1,264], index: 3, kind: input, shape index: {}]
  %s4 = inlined_call_operand.hbm [shape: f32[2,32], index: 4, kind: output, shape index: {0}]
  %s5 = inlined_call_operand.hbm [shape: f32[2,256], index: 5, kind: output, shape index: {1}]
  %6 = xla_tuple %s4, %s5
  %s7 = sld [smem:[#allocation0]]
  $region34: #{tpu_custom_call.1} parent=0
    _
  %s9 = ssub.s32 1, %s7
  %s10 = scalar_select 0, %s9, %s7
  $region1: #{tpu_custom_call.1} parent=0
    #allocation2 [shape = 'u8[4096]{0}', space=vmem, size = 0x1000, scoped, tag = 'output window, operand 0, single buffered']
    #allocation3 [shape = 's32[1]{0}', space=sflag, size = 0x4, scoped, tag = 'scoped memory for tpu_custom_call.1']
    #allocation4 [shape = 'u8[8192]{0}', space=vmem, size = 0x2000, scoped, tag = 'output window, operand 1, single buffered']
    #allocation5 [shape = 's32[1]{0}', space=sflag, size = 0x4, scoped, tag = 'scoped memory for tpu_custom_call.1']
    %11 = vsyncpa [#allocation3], 0
    %12 = vsyncpa [#allocation5], 0
    // Predicated region
    $region2: #{tpu_custom_call.1} parent=1 // pred_check
      _
    $region3: #{tpu_custom_call.1} parent=1 // pred_check_branch
      %14 = sbr.rel (0) target = $region5
    $region4: #{tpu_custom_call.1} parent=1 // pred_region
      _
    $region5: #{tpu_custom_call.1} parent=1 // pred_fallthru
      _
    // Predicated region
    $region6: #{tpu_custom_call.1} parent=1 // pred_check
      _
    $region7: #{tpu_custom_call.1} parent=1 // pred_check_branch
      %16 = sbr.rel (0) target = $region9
    $region8: #{tpu_custom_call.1} parent=1 // pred_region
      _
    $region9: #{tpu_custom_call.1} parent=1 // pred_fallthru
      _
    // Predicated region
    $region10: #{tpu_custom_call.1} parent=1 // pred_check
      _
    $region11: #{tpu_custom_call.1} parent=1 // pred_check_branch
      %18 = sbr.rel (0) target = $region13
    $region12: #{tpu_custom_call.1} parent=1 // pred_region
      _
    $region13: #{tpu_custom_call.1} parent=1 // pred_fallthru
      _
    // Predicated region
    $region14: #{tpu_custom_call.1} parent=1 // pred_check
      _
    $region15: #{tpu_custom_call.1} parent=1 // pred_check_branch
      %20 = sbr.rel (0) target = $region17
    $region16: #{tpu_custom_call.1} parent=1 // pred_region
      _
    $region17: #{tpu_custom_call.1} parent=1 // pred_fallthru
      _
    %v22 = vld [vmem:[%s0] sm:$0x1]
    %v23 = vld [vmem:[%s0 + $0x1] sm:$0x1]
    %v24 = vld [vmem:[%s0 + $0x2] sm:$0x1]
    %v25 = vld [vmem:[%s0 + $0x3] sm:$0x1]
    %v26 = vld [vmem:[%s2] sm:$0xff]
    %v27 = vld [vmem:[%s2 + $0x8] sm:$0xf]
    %v28 = vld [vmem:[%s2 + $0xc] sm:$0xff]
    %v29 = vld [vmem:[%s2 + $0x14] sm:$0xf]
    %v30 = vld [vmem:[%s2 + $0x18] sm:$0xff]
    %v31 = vld [vmem:[%s2 + $0x20] sm:$0xf]
    %v32 = vld [vmem:[%s2 + $0x24] sm:$0xff]
    %v33 = vld [vmem:[%s2 + $0x2c] sm:$0xf]
    %v34 = vld [vmem:[%s2 + $0x30] sm:$0xff]
    %v35 = vld [vmem:[%s2 + $0x38] sm:$0xf]
    %v36 = vld [vmem:[%s2 + $0x3c] sm:$0xff]
    %v37 = vld [vmem:[%s2 + $0x44] sm:$0xf]
    %v38 = vld [vmem:[%s2 + $0x48] sm:$0xff]
    %v39 = vld [vmem:[%s2 + $0x50] sm:$0xf]
    %v40 = vld [vmem:[%s2 + $0x54] sm:$0xff]
    %v41 = vld [vmem:[%s2 + $0x5c] sm:$0xf]
    %v42 = vld [vmem:[%s2 + $0x60] sm:$0xff]
    %v43 = vld [vmem:[%s2 + $0x68] sm:$0xf]
    %v44 = vld [vmem:[%s2 + $0x6c] sm:$0xff]
    %v45 = vld [vmem:[%s2 + $0x74] sm:$0xf]
    %v46 = vld [vmem:[%s2 + $0x78] sm:$0xff]
    %v47 = vld [vmem:[%s2 + $0x80] sm:$0xf]
    %v48 = vld [vmem:[%s2 + $0x84] sm:$0xff]
    %v49 = vld [vmem:[%s2 + $0x8c] sm:$0xf]
    %v50 = vld [vmem:[%s2 + $0x90] sm:$0xff]
    %v51 = vld [vmem:[%s2 + $0x98] sm:$0xf]
    %v52 = vld [vmem:[%s2 + $0x9c] sm:$0xff]
    %v53 = vld [vmem:[%s2 + $0xa4] sm:$0xf]
    %v54 = vld [vmem:[%s2 + $0xa8] sm:$0xff]
    %v55 = vld [vmem:[%s2 + $0xb0] sm:$0xf]
    %v56 = vld [vmem:[%s2 + $0xb4] sm:$0xff]
    %v57 = vld [vmem:[%s2 + $0xbc] sm:$0xf]
    %v58 = vld [vmem:[%s3] sm:$0x7]
    %v60 = vlaneseq
    %v61 = vshrl.u32 %v60, 7
    %v62 = vsub.s32 0, %v61
    %v63 = vrot.slane %v58, %v62
    %v64 = vlaneseq
    %v65 = vshrl.u32 %v64, 7
    %v66 = vsub.s32 1, %v65
    %v67 = vrot.slane %v58, %v66
    %v68 = vlaneseq
    %v69 = vshrl.u32 %v68, 7
    %v70 = vsub.s32 2, %v69
    %v71 = vrot.slane %v58, %v70
    %v79 = vcombine.low %v22, %v23
    %v80 = vcombine.low %v24, %v25
    %v82 = vunpack.c.l.s4 1966171168
    %v83 = vunpack.c.0.s8 %v82
    %v84 = vlaneseq
    %v85 = vshrl.u32 %v84, 7
    %v86 = vsub.s32 %v83, %v85
    %v87 = vrot.slane %v79, %v86
    %v89 = vunpack.c.l.s4 1966171168
    %v90 = vunpack.c.0.s8 %v89
    %v91 = vlaneseq
    %v92 = vshrl.u32 %v91, 7
    %v93 = vsub.s32 %v90, %v92
    %v94 = vrot.slane %v80, %v93
    %v95 = vcombine.low %v87, %v94
    %v97 = vunpack.c.l.s4 1966171168
    %v98 = vunpack.c.0.s8 %v97
    %v99 = vlaneseq
    %v100 = vshrl.u32 %v99, 7
    %v101 = vsub.s32 %v98, %v100
    %v102 = vrot.slane %v95, %v101
    %v136 = vunpack.c.l.b16 %v26
    %v137 = vunpack.c.h.b16 %v26
    %v138 = vunpack.c.l.b16 %v27
    %v139 = vunpack.c.l.b16 %v28
    %v140 = vunpack.c.h.b16 %v28
    %v141 = vunpack.c.l.b16 %v29
    %v142 = vunpack.c.l.b16 %v30
    %v143 = vunpack.c.h.b16 %v30
    %v144 = vunpack.c.l.b16 %v31
    %v145 = vunpack.c.l.b16 %v32
    %v146 = vunpack.c.h.b16 %v32
    %v147 = vunpack.c.l.b16 %v33
    %v148 = vunpack.c.l.b16 %v34
    %v149 = vunpack.c.h.b16 %v34
    %v150 = vunpack.c.l.b16 %v35
    %v151 = vunpack.c.l.b16 %v36
    %v152 = vunpack.c.h.b16 %v36
    %v153 = vunpack.c.l.b16 %v37
    %v154 = vunpack.c.l.b16 %v38
    %v155 = vunpack.c.h.b16 %v38
    %v156 = vunpack.c.l.b16 %v39
    %v157 = vunpack.c.l.b16 %v40
    %v158 = vunpack.c.h.b16 %v40
    %v159 = vunpack.c.l.b16 %v41
    %v160 = vunpack.c.l.b16 %v42
    %v161 = vunpack.c.h.b16 %v42
    %v162 = vunpack.c.l.b16 %v43
    %v163 = vunpack.c.l.b16 %v44
    %v164 = vunpack.c.h.b16 %v44
    %v165 = vunpack.c.l.b16 %v45
    %v166 = vunpack.c.l.b16 %v46
    %v167 = vunpack.c.h.b16 %v46
    %v168 = vunpack.c.l.b16 %v47
    %v169 = vunpack.c.l.b16 %v48
    %v170 = vunpack.c.h.b16 %v48
    %v171 = vunpack.c.l.b16 %v49
    %v172 = vunpack.c.l.b16 %v50
    %v173 = vunpack.c.h.b16 %v50
    %v174 = vunpack.c.l.b16 %v51
    %v175 = vunpack.c.l.b16 %v52
    %v176 = vunpack.c.h.b16 %v52
    %v177 = vunpack.c.l.b16 %v53
    %v178 = vunpack.c.l.b16 %v54
    %v179 = vunpack.c.h.b16 %v54
    %v180 = vunpack.c.l.b16 %v55
    %v181 = vunpack.c.l.b16 %v56
    %v182 = vunpack.c.h.b16 %v56
    %v183 = vunpack.c.l.b16 %v57
    %v184 = vpack.c.b16 %v139, %v136
    %v185 = vpack.c.b16 %v140, %v137
    %v186 = vpack.c.b16 %v141, %v138
    %v187 = vpack.c.b16 %v145, %v142
    %v188 = vpack.c.b16 %v146, %v143
    %v189 = vpack.c.b16 %v147, %v144
    %v190 = vpack.c.b16 %v151, %v148
    %v191 = vpack.c.b16 %v152, %v149
    %v192 = vpack.c.b16 %v153, %v150
    %v193 = vpack.c.b16 %v157, %v154
    %v194 = vpack.c.b16 %v158, %v155
    %v195 = vpack.c.b16 %v159, %v156
    %v196 = vpack.c.b16 %v163, %v160
    %v197 = vpack.c.b16 %v164, %v161
    %v198 = vpack.c.b16 %v165, %v162
    %v199 = vpack.c.b16 %v169, %v166
    %v200 = vpack.c.b16 %v170, %v167
    %v201 = vpack.c.b16 %v171, %v168
    %v202 = vpack.c.b16 %v175, %v172
    %v203 = vpack.c.b16 %v176, %v173
    %v204 = vpack.c.b16 %v177, %v174
    %v205 = vpack.c.b16 %v181, %v178
    %v206 = vpack.c.b16 %v182, %v179
    %v207 = vpack.c.b16 %v183, %v180
    %232 = vmatprep.subr.bf16.mxu0 %v185
    %233 = vmatpush1.bf16.msra.mxu0 %v184
    %234 = vmatprep.subr.bf16.mxu0 %v188
    %235 = vmatpush1.bf16.msra.mxu0 %v187
    %236 = vmatprep.subr.bf16.mxu0 %v191
    %237 = vmatpush1.bf16.msra.mxu0 %v190
    %238 = vmatprep.subr.bf16.mxu0 %v194
    %239 = vmatpush1.bf16.msra.mxu0 %v193
    %240 = vmatprep.subr.bf16.mxu0 %v197
    %241 = vmatpush1.bf16.msra.mxu0 %v196
    %242 = vmatprep.subr.bf16.mxu0 %v200
    %243 = vmatpush1.bf16.msra.mxu0 %v199
    %244 = vmatprep.subr.bf16.mxu0 %v203
    %245 = vmatpush1.bf16.msra.mxu0 %v202
    %246 = vmatprep.subr.bf16.mxu0 %v206
    %247 = vmatpush1.bf16.msra.mxu0 %v205
    %248 = vmatprep.subr.bf16.mxu0 0
    %249 = vmatpush1.bf16.msra.mxu0 0
    %250 = vmatprep.subr.bf16.mxu0 0
    %251 = vmatpush1.bf16.msra.mxu0 0
    %252 = vmatprep.subr.bf16.mxu0 0
    %253 = vmatpush1.bf16.msra.mxu0 0
    %254 = vmatprep.subr.bf16.mxu0 0
    %255 = vmatpush1.bf16.msra.mxu0 0
    %256 = vmatprep.subr.bf16.mxu0 0
    %257 = vmatpush1.bf16.msra.mxu0 0
    %258 = vmatprep.subr.bf16.mxu0 0
    %259 = vmatpush1.bf16.msra.mxu0 0
    %260 = vmatprep.subr.bf16.mxu0 0
    %261 = vmatpush1.bf16.msra.mxu0 0
    %262 = vmatprep.subr.bf16.mxu0 0
    %263 = vmatpush1.bf16.msra.mxu0 0
    %264 = vmatprep.mubr.bf16.mxu0 0
    %265 = vmatmul.mubr.bf16.gmra.mrb[0].mxu0 %v102
    %v266 = vpop.f32.mrb[0].mxu0
    %v267 = vadd.f32 %v63, %v266
    %v268 = vpop.f32.mrb[0].mxu0
    %v269 = vadd.f32 %v67, %v268
    %v270 = vpop.f32.mrb[0].mxu0
    %v271 = vpop.f32.mrb[0].mxu0
    %272 = vdwg.mxu0
    %273 = vmatprep.subr.bf16.mxu0 0
    %274 = vmatpush1.bf16.msra.mxu0 %v186
    %275 = vmatprep.subr.bf16.mxu0 0
    %276 = vmatpush1.bf16.msra.mxu0 %v189
    %277 = vmatprep.subr.bf16.mxu0 0
    %278 = vmatpush1.bf16.msra.mxu0 %v192
    %279 = vmatprep.subr.bf16.mxu0 0
    %280 = vmatpush1.bf16.msra.mxu0 %v195
    %281 = vmatprep.subr.bf16.mxu0 0
    %282 = vmatpush1.bf16.msra.mxu0 %v198
    %283 = vmatprep.subr.bf16.mxu0 0
    %284 = vmatpush1.bf16.msra.mxu0 %v201
    %285 = vmatprep.subr.bf16.mxu0 0
    %286 = vmatpush1.bf16.msra.mxu0 %v204
    %287 = vmatprep.subr.bf16.mxu0 0
    %288 = vmatpush1.bf16.msra.mxu0 %v207
    %289 = vmatprep.subr.bf16.mxu0 0
    %290 = vmatpush1.bf16.msra.mxu0 0
    %291 = vmatprep.subr.bf16.mxu0 0
    %292 = vmatpush1.bf16.msra.mxu0 0
    %293 = vmatprep.subr.bf16.mxu0 0
    %294 = vmatpush1.bf16.msra.mxu0 0
    %295 = vmatprep.subr.bf16.mxu0 0
    %296 = vmatpush1.bf16.msra.mxu0 0
    %297 = vmatprep.subr.bf16.mxu0 0
    %298 = vmatpush1.bf16.msra.mxu0 0
    %299 = vmatprep.subr.bf16.mxu0 0
    %300 = vmatpush1.bf16.msra.mxu0 0
    %301 = vmatprep.subr.bf16.mxu0 0
    %302 = vmatpush1.bf16.msra.mxu0 0
    %303 = vmatprep.subr.bf16.mxu0 0
    %304 = vmatpush1.bf16.msra.mxu0 0
    %305 = vmatprep.mubr.bf16.mxu0 0
    %306 = vmatmul.mubr.bf16.gmra.mrb[0].mxu0 %v102
    %v307 = vpop.f32.mrb[0].mxu0
    %v308 = vadd.f32 %v71, %v307
    %v309 = vpop.f32.mrb[0].mxu0
    %v310 = vpop.f32.mrb[0].mxu0
    %v311 = vpop.f32.mrb[0].mxu0
    %312 = vdwg.mxu0
    %v315 = vcombine.low %v267, %v269
    %v316 = vcombine.high %v267, %v269
    %v318 = vunpack.c.l.s4 1983009808
    %v319 = vunpack.c.0.s8 %v318
    %v320 = vlaneseq
    %v321 = vshrl.u32 %v320, 7
    %v322 = vsub.s32 %v319, %v321
    %v323 = vrot.slane %v315, %v322
    %v325 = vunpack.c.l.s4 1983009808
    %v326 = vunpack.c.0.s8 %v325
    %v327 = vlaneseq
    %v328 = vshrl.u32 %v327, 7
    %v329 = vsub.s32 %v326, %v328
    %v330 = vrot.slane %v316, %v329
    %v331 = vcombine.high %v323, %v323
    %v332 = vcombine.high %v330, %v330
    %337 = vst [vmem:[#allocation4] sm:$0xf] %v323
    %338 = vst [vmem:[#allocation4 + $0x4] sm:$0xf] %v331
    %339 = vst [vmem:[#allocation4 + $0x8] sm:$0xf] %v330
    %340 = vst [vmem:[#allocation4 + $0xc] sm:$0xf] %v332
    %v341 = vld [vmem:[%s1] sm:$0xff]
    %343 = vset.pattern.permute.xlu0 0
    %344 = vperm.xlu0 %343, %v341
    %v345 = vpop.permute.xlu0 %344
    %v347 = vadd.f32 %v345, %v308
    %vm348 = vcmp.ge.f32.partialorder %v347, 0.0
    %v349 = vmul.f32 %v347, 0.2
    %v350 = vsel %vm348, %v347, %v349
    %vm351 = vcmask 64512
    %v352 = vsel %vm351, %v350, -inf
    %353 = vmax.xlane.f32.xlu0 %v352
    %v354 = vpop.xlane.xlu0 %353
    %v355 = vsub.f32 %v350, %v354
    %v356 = vmul.f32 %v355, 1.442695
    %v357 = vpow.pop %v356
    %v358 = vsel %vm351, %v357, 0.0
    %359 = vadd.xlane.f32.xlu0 %v358
    %v360 = vpop.xlane.xlu0 %359
    %v361 = vrcp.pop %v360
    %v362 = vmul.f32 %v357, %v361
    %364 = vset.pattern.permute.xlu0 0
    %365 = vperm.xlu0 %364, %v362
    %v366 = vpop.permute.xlu0 %365
    %v368 = vmul.f32 %v366, %v267
    %369 = vset.pattern.permute.xlu0 1
    %370 = vperm.xlu0 %369, %v362
    %v371 = vpop.permute.xlu0 %370
    %v373 = vmul.f32 %v371, %v267
    %375 = vrot.lane.b32.xlu0 %v373, 96
    %v376 = vpop.permute.xlu0 %375
    %v378 = vadd.f32 %v368, %v376
    %379 = vset.pattern.permute.xlu0 2
    %380 = vperm.xlu0 %379, %v362
    %v381 = vpop.permute.xlu0 %380
    %v383 = vmul.f32 %v381, %v267
    %385 = vrot.lane.b32.xlu0 %v383, 64
    %v386 = vpop.permute.xlu0 %385
    %v388 = vadd.f32 %v378, %v386
    %389 = vset.pattern.permute.xlu0 3
    %390 = vperm.xlu0 %389, %v362
    %v391 = vpop.permute.xlu0 %390
    %v393 = vmul.f32 %v391, %v267
    %395 = vrot.lane.b32.xlu0 %v393, 32
    %v396 = vpop.permute.xlu0 %395
    %v398 = vadd.f32 %v388, %v396
    %399 = vset.pattern.permute.xlu0 4
    %400 = vperm.xlu0 %399, %v362
    %v401 = vpop.permute.xlu0 %400
    %v403 = vmul.f32 %v401, %v269
    %v404 = vadd.f32 %v398, %v403
    %405 = vset.pattern.permute.xlu0 5
    %406 = vperm.xlu0 %405, %v362
    %v407 = vpop.permute.xlu0 %406
    %v409 = vmul.f32 %v407, %v269
    %411 = vrot.lane.b32.xlu0 %v409, 96
    %v412 = vpop.permute.xlu0 %411
    %v414 = vadd.f32 %v404, %v412
    %415 = vset.pattern.permute.xlu0 6
    %416 = vperm.xlu0 %415, %v362
    %v417 = vpop.permute.xlu0 %416
    %v419 = vmul.f32 %v417, %v269
    %421 = vrot.lane.b32.xlu0 %v419, 64
    %v422 = vpop.permute.xlu0 %421
    %v424 = vadd.f32 %v414, %v422
    %425 = vset.pattern.permute.xlu0 7
    %426 = vperm.xlu0 %425, %v362
    %v427 = vpop.permute.xlu0 %426
    %v429 = vmul.f32 %v427, %v269
    %431 = vrot.lane.b32.xlu0 %v429, 32
    %v432 = vpop.permute.xlu0 %431
    %v434 = vadd.f32 %v424, %v432
    %vm435 = vcmask 261120
    %436 = vst.msk [vmem:[#allocation2] sm:$0xff] %vm435, %v434
    // Predicated region
    $region18: #{tpu_custom_call.1} parent=1 // pred_check
      _
    $region19: #{tpu_custom_call.1} parent=1 // pred_check_branch
      %438 = sbr.rel (0) target = $region21
    $region20: #{tpu_custom_call.1} parent=1 // pred_region
      %s440 = ssub.s32 128, 32
      %441 = vsyncadd [#allocation3], %s440
      %s442 = sshll.u32 [#allocation2], 4
      %s443 = int_to_ptr.vmem [resolvable:$true] %s442
      %448 = dma.vmem_to_hbm [thread:$0]  %s443, 32, %s4, [#allocation3], 32, 32, 2
    $region21: #{tpu_custom_call.1} parent=1 // pred_fallthru
      _
    // Predicated region
    $region22: #{tpu_custom_call.1} parent=1 // pred_check
      _
    $region23: #{tpu_custom_call.1} parent=1 // pred_check_branch
      %450 = sbr.rel (0) target = $region25
    $region24: #{tpu_custom_call.1} parent=1 // pred_region
      %s452 = ssub.s32 256, 64
      %453 = vsyncadd [#allocation5], %s452
      %s454 = sshll.u32 [#allocation4], 4
      %s455 = int_to_ptr.vmem [resolvable:$true] %s454
      %460 = dma.vmem_to_hbm [thread:$0]  %s455, 64, %s5, [#allocation5], 64, 64, 4
    $region25: #{tpu_custom_call.1} parent=1 // pred_fallthru
      _
    // Predicated region
    $region26: #{tpu_custom_call.1} parent=1 // pred_check
      _
    $region27: #{tpu_custom_call.1} parent=1 // pred_check_branch
      %462 = sbr.rel (0) target = $region29
    $region28: #{tpu_custom_call.1} parent=1 // pred_region
      %463 = dma.done [#allocation3], 128
    $region29: #{tpu_custom_call.1} parent=1 // pred_fallthru
      _
    // Predicated region
    $region30: #{tpu_custom_call.1} parent=1 // pred_check
      _
    $region31: #{tpu_custom_call.1} parent=1 // pred_check_branch
      %465 = sbr.rel (0) target = $region33
    $region32: #{tpu_custom_call.1} parent=1 // pred_region
      %466 = dma.done [#allocation5], 256
    $region33: #{tpu_custom_call.1} parent=1 // pred_fallthru
      _
    %467 = vsyncpa [#allocation3], 1
    %468 = vsyncpa [#allocation5], 1

</llo_original>
